<compile_context>
chip_gen: v5e
topology: v5e:2x2
jax: 0.10.0
libtpu: 0.0.40
codegen_flags: <defaults>
</compile_context>

<pallas_src>
import functools

import jax
import jax.numpy as jnp
from jax.experimental import pallas as pl
from jax.experimental.pallas import tpu as pltpu

_INV_SQRT2 = 0.7071067811865476


def _round_up(a, b):
    return -(-a // b) * b


def _gelu_exact(h):
    # Exact (erf-based) GELU in f32, matching torch.nn.functional.gelu's default.
    # TODO(synk): if a v5e bundle dump shows VALU-bound (erf lowers to a VPU polynomial),
    # switch to tanh-approximate GELU (single EUP op) at some numerics cost.
    return 0.5 * h * (1.0 + jax.lax.erf(h * jnp.float32(_INV_SQRT2)))


# --------------------------------------------------------------------------- kernels
def _mlp_kernel_fused(x_ref, w1_ref, b1_ref, w2_ref, b2_ref, o_ref):
    """Collapsed-M variant: weights resident in VMEM, 1-D grid over row tiles."""
    h = jnp.dot(x_ref[...], w1_ref[...], preferred_element_type=jnp.float32)
    h = _gelu_exact(h + b1_ref[...].astype(jnp.float32))
    # drop1 / drop2: identity (eval mode)
    out = jnp.dot(h.astype(w2_ref.dtype), w2_ref[...],
                  preferred_element_type=jnp.float32)
    o_ref[...] = (out + b2_ref[...].astype(jnp.float32)).astype(o_ref.dtype)


def _mlp_kernel_tiled_f32out(x_ref, w1_ref, b1_ref, w2_ref, b2_ref, o_ref):
    """M-tiled reduction, f32 output: accumulate directly into the resident out block."""
    j = pl.program_id(1)

    @pl.when(j == 0)
    def _():
        o_ref[...] = jnp.zeros_like(o_ref)

    h = jnp.dot(x_ref[...], w1_ref[...], preferred_element_type=jnp.float32)
    h = _gelu_exact(h + b1_ref[...].astype(jnp.float32))
    o_ref[...] += jnp.dot(h.astype(w2_ref.dtype), w2_ref[...],
                          preferred_element_type=jnp.float32)

    @pl.when(j == pl.num_programs(1) - 1)
    def _():
        o_ref[...] += b2_ref[...].astype(jnp.float32)


def _mlp_kernel_tiled_acc(x_ref, w1_ref, b1_ref, w2_ref, b2_ref, o_ref, acc_ref):
    """M-tiled reduction, non-f32 output: f32 VMEM scratch accumulator."""
    j = pl.program_id(1)

    @pl.when(j == 0)
    def _():
        acc_ref[...] = jnp.zeros_like(acc_ref)

    h = jnp.dot(x_ref[...], w1_ref[...], preferred_element_type=jnp.float32)
    h = _gelu_exact(h + b1_ref[...].astype(jnp.float32))
    acc_ref[...] += jnp.dot(h.astype(w2_ref.dtype), w2_ref[...],
                            preferred_element_type=jnp.float32)

    @pl.when(j == pl.num_programs(1) - 1)
    def _():
        o_ref[...] = (acc_ref[...] + b2_ref[...].astype(jnp.float32)).astype(o_ref.dtype)


# --------------------------------------------------------------------------- config
@functools.lru_cache(maxsize=None)
def _tpu_config():
    """Generation-aware VMEM budget and tile defaults."""
    vmem_bytes = None
    try:
        vmem_bytes = int(pltpu.get_tpu_info().vmem_capacity_bytes)
    except Exception:
        pass
    if vmem_bytes is None:
        try:
            kind = jax.devices()[0].device_kind.lower()
            vmem_bytes = 128 * 1024 * 1024 if ("v5" in kind or "v6" in kind) else 64 * 1024 * 1024
        except Exception:
            vmem_bytes = 64 * 1024 * 1024
    if vmem_bytes >= 128 * 1024 * 1024:
        # v5e / v6e: 128 MiB VMEM, single TensorCore per chip.
        return dict(vmem_limit=96 * 1024 * 1024, block_rows=512, block_m=1024,
                    multi_core=False)
    # v7x-class: 64 MiB VMEM per TensorCore, 2 TCs per chip.
    return dict(vmem_limit=48 * 1024 * 1024, block_rows=256, block_m=512,
                multi_core=True)


# --------------------------------------------------------------------------- wrapper
def prepare_params(w1, b1, w2, b2):
    """Pre-pad weights/biases ONCE to lane-aligned shapes (outside the per-call path).

    Weights are stored transposed vs. PyTorch (dense.weight.T) so the kernel computes
    out = gelu(x @ w1 + b1) @ w2 + b2.  Zero-padding is exact (gelu(0) == 0 and padded
    weight rows/cols are zero).
    """
    E, M = w1.shape
    Ep, Mp = _round_up(E, 128), _round_up(M, 128)
    if (Ep, Mp) != (E, M):
        w1 = jnp.pad(w1, ((0, Ep - E), (0, Mp - M)))
        w2 = jnp.pad(w2, ((0, Mp - M), (0, Ep - E)))
        b1 = jnp.pad(b1, (0, Mp - M))
        b2 = jnp.pad(b2, (0, Ep - E))
    return dict(w1=w1, b1=b1.reshape(1, Mp), w2=w2, b2=b2.reshape(1, Ep), emb_dim=E)


@functools.partial(
    jax.jit,
    static_argnames=("emb_dim", "block_rows", "block_m", "vmem_limit",
                     "multi_core", "collapse"))
def _mlp_block_impl(x, w1p, b1p, w2p, b2p, *, emb_dim, block_rows, block_m,
                    vmem_limit, multi_core, collapse):
    B, S, E_in = x.shape
    assert E_in == emb_dim
    Ep, Mp = w1p.shape
    N = B * S

    x_bytes = x.dtype.itemsize
    w_bytes = w1p.dtype.itemsize
    o_bytes = x.dtype.itemsize
    f32_out = x.dtype == jnp.float32
    budget = vmem_limit - (4 << 20)  # headroom for compiler-internal scratch

    # ---- row tile ----------------------------------------------------------
    tm = _round_up(min(block_rows, _round_up(N, 8)), 8)
    if multi_core and pl.cdiv(N, tm) < 2 and N > 8:
        # v7x: make sure both TensorCores on the chip get at least one row tile.
        tm = _round_up(pl.cdiv(N, 2), 8)

    # ---- collapsed-reduction check (weights resident in VMEM) --------------
    def fused_fits(tm_):
        b = (2 * tm_ * Ep * x_bytes                       # x double-buffer
             + 2 * (Ep * Mp + Mp * Ep) * w_bytes          # weights (conservative 2x)
             + 2 * (Mp + Ep) * w_bytes                    # biases
             + 2 * tm_ * Ep * o_bytes                     # out double-buffer
             + 2 * tm_ * Mp * 4)                          # f32 h intermediate + temps
        return b <= budget

    do_collapse = collapse if collapse is not None else fused_fits(tm)

    if do_collapse:
        tM = Mp
    else:
        tM = _round_up(min(block_m, Mp), 128)

        def tiled_fits(tm_, tM_):
            acc = 0 if f32_out else tm_ * Ep * 4
            b = (2 * tm_ * Ep * x_bytes
                 + 2 * (Ep * tM_ + tM_ * Ep) * w_bytes
                 + 2 * (tM_ + Ep) * w_bytes
                 + 2 * tm_ * Ep * o_bytes
                 + acc
                 + 2 * tm_ * tM_ * 4)
            return b <= budget

        while tM > 128 and not tiled_fits(tm, tM):
            tM = _round_up(tM // 2, 128)
        while tm > 8 and not tiled_fits(tm, tM):
            # TODO(synk): for very large E on v7x, tile output columns instead of
            # shrinking the row tile (keeps both matmuls on large MXU tiles).
            tm = _round_up(tm // 2, 8)

        # Round padded M up to a multiple of tM (exact; avoids tiny-divisor tM).
        Mp_t = _round_up(Mp, tM)
        if Mp_t != Mp:  # only for awkward M; common case skips this pad entirely
            w1p = jnp.pad(w1p, ((0, 0), (0, Mp_t - Mp)))
            w2p = jnp.pad(w2p, ((0, Mp_t - Mp), (0, 0)))
            b1p = jnp.pad(b1p, ((0, 0), (0, Mp_t - Mp)))
            Mp = Mp_t

    Np = _round_up(N, tm)

    # ---- per-call activation padding (statically skipped when aligned) -----
    x2d = x.reshape(N, E_in)
    if Np != N or Ep != E_in:
        x2d = jnp.pad(x2d, ((0, Np - N), (0, Ep - E_in)))

    if do_collapse:
        out2d = pl.pallas_call(
            _mlp_kernel_fused,
            out_shape=jax.ShapeDtypeStruct((Np, Ep), x.dtype),
            grid_spec=pltpu.PrefetchScalarGridSpec(
                num_scalar_prefetch=0,
                grid=(Np // tm,),
                in_specs=[
                    pl.BlockSpec((tm, Ep), lambda i: (i, 0)),   # x row tile
                    pl.BlockSpec((Ep, Mp), lambda i: (0, 0)),   # w1 (resident)
                    pl.BlockSpec((1, Mp), lambda i: (0, 0)),    # b1 (resident)
                    pl.BlockSpec((Mp, Ep), lambda i: (0, 0)),   # w2 (resident)
                    pl.BlockSpec((1, Ep), lambda i: (0, 0)),    # b2 (resident)
                ],
                out_specs=pl.BlockSpec((tm, Ep), lambda i: (i, 0)),
            ),
            compiler_params=pltpu.CompilerParams(
                dimension_semantics=("parallel",),
                vmem_limit_bytes=vmem_limit,
            ),
        )(x2d, w1p, b1p, w2p, b2p)
    else:
        kernel = _mlp_kernel_tiled_f32out if f32_out else _mlp_kernel_tiled_acc
        scratch = [] if f32_out else [pltpu.VMEM((tm, Ep), jnp.float32)]
        out2d = pl.pallas_call(
            kernel,
            out_shape=jax.ShapeDtypeStruct((Np, Ep), x.dtype),
            grid_spec=pltpu.PrefetchScalarGridSpec(
                num_scalar_prefetch=0,
                grid=(Np // tm, Mp // tM),
                in_specs=[
                    pl.BlockSpec((tm, Ep), lambda i, j: (i, 0)),   # x rows (resident over j)
                    pl.BlockSpec((Ep, tM), lambda i, j: (0, j)),   # w1 M-tile
                    pl.BlockSpec((1, tM), lambda i, j: (0, j)),    # b1 M-tile
                    pl.BlockSpec((tM, Ep), lambda i, j: (j, 0)),   # w2 M-tile
                    pl.BlockSpec((1, Ep), lambda i, j: (0, 0)),    # b2 (constant)
                ],
                out_specs=pl.BlockSpec((tm, Ep), lambda i, j: (i, 0)),
                scratch_shapes=scratch,
            ),
            compiler_params=pltpu.CompilerParams(
                dimension_semantics=("parallel", "arbitrary"),
                vmem_limit_bytes=vmem_limit,
            ),
        )(x2d, w1p, b1p, w2p, b2p)

    if Np != N or Ep != E_in:
        out2d = out2d[:N, :E_in]
    return out2d.reshape(B, S, E_in)


def mlp_block(x, params, *, block_rows=None, block_m=None, vmem_limit=None,
              collapse=None):
    """out = drop2(dense2(drop1(gelu(dense1(x))))); dropout is identity (eval mode)."""
    cfg = _tpu_config()
    return _mlp_block_impl(
        x, params["w1"], params["b1"], params["w2"], params["b2"],
        emb_dim=params["emb_dim"],
        block_rows=cfg["block_rows"] if block_rows is None else block_rows,
        block_m=cfg["block_m"] if block_m is None else block_m,
        vmem_limit=cfg["vmem_limit"] if vmem_limit is None else vmem_limit,
        multi_core=cfg["multi_core"],
        collapse=collapse,
    )


# --------------------------------------------------------------------------- test utils
def init_params(key, emb_dim, mlp_dim, dtype=jnp.float32):
    """Mirrors the PyTorch module's init (weights stored transposed: dense.weight.T)."""
    k1, k2, k3, k4 = jax.random.split(key, 4)
    bound1 = (6.0 / (emb_dim + mlp_dim)) ** 0.5
    bound2 = (6.0 / (mlp_dim + emb_dim)) ** 0.5
    w1 = jax.random.uniform(k1, (emb_dim, mlp_dim), jnp.float32,
                            minval=-bound1, maxval=bound1).astype(dtype)
    w2 = jax.random.uniform(k2, (mlp_dim, emb_dim), jnp.float32,
                            minval=-bound2, maxval=bound2).astype(dtype)
    b1 = (1e-6 * jax.random.normal(k3, (mlp_dim,))).astype(dtype)
    b2 = (1e-6 * jax.random.normal(k4, (emb_dim,))).astype(dtype)
    return w1, b1, w2, b2


def mlp_block_ref(x, w1, b1, w2, b2):
    h = jnp.dot(x.astype(jnp.float32), w1.astype(jnp.float32)) + b1.astype(jnp.float32)
    h = jax.nn.gelu(h, approximate=False)
    return jnp.dot(h, w2.astype(jnp.float32)) + b2.astype(jnp.float32)


if __name__ == "__main__":
    key = jax.random.PRNGKey(0)

    # (batch, seq, emb_dim, mlp_dim, dtype, kwargs, tol)
    configs = [
        # tiny, non-128-aligned dims -> lane/row padding + collapsed (resident-weight) path
        (2, 8, 32, 64, jnp.float32, {}, 1e-4),
        # lane-dense, weights fit VMEM -> collapsed path, no per-call padding at all
        (2, 256, 128, 1024, jnp.float32, {}, 1e-4),
        # force the M-tiled reduction path: f32 accumulate-directly-into-output variant
        (2, 256, 128, 1024, jnp.float32, dict(collapse=False, block_m=256), 1e-4),
        # awkward M (not a multiple of block_m): M rounded up to a tM multiple (exact)
        (2, 64, 128, 896, jnp.float32, dict(collapse=False, block_m=512), 1e-4),
        # bf16 operands: tiled path with f32 scratch accumulator (looser tolerance)
        (2, 256, 128, 1024, jnp.bfloat16, dict(collapse=False, block_m=256), 5e-2),
    ]

    for (batch, seq, emb_dim, mlp_dim, dtype, kwargs, tol) in configs:
        key, kx, kp = jax.random.split(key, 3)
        x = jax.random.normal(kx, (batch, seq, emb_dim), dtype=jnp.float32).astype(dtype)
        w1, b1, w2, b2 = init_params(kp, emb_dim, mlp_dim, dtype=dtype)
        params = prepare_params(w1, b1, w2, b2)

        out = jax.block_until_ready(mlp_block(x, params, **kwargs))
        assert out.shape == (batch, seq, emb_dim)
        assert out.dtype == dtype

        ref = mlp_block_ref(x, w1, b1, w2, b2)
        assert jnp.allclose(out.astype(jnp.float32), ref, atol=tol, rtol=tol), (
            f"mismatch vs pure-JAX reference for config "
            f"{(batch, seq, emb_dim, mlp_dim, dtype)}"
        )

    print("KERNEL_OK")
</pallas_src>

<mosaic_0001>
module attributes {stable_mosaic.version = 11 : i64} {
  func.func @_mlp_kernel_fused(%arg0: i32, %arg1: memref<8x128xf32, #tpu.memory_space<vmem>>, %arg2: memref<128x128xf32, #tpu.memory_space<vmem>>, %arg3: memref<1x128xf32, #tpu.memory_space<vmem>>, %arg4: memref<128x128xf32, #tpu.memory_space<vmem>>, %arg5: memref<1x128xf32, #tpu.memory_space<vmem>>, %arg6: memref<8x128xf32, #tpu.memory_space<vmem>>) attributes {dimension_semantics = [#tpu.dimension_semantics<parallel>], iteration_bounds = array<i64: 2>, scalar_prefetch = 0 : i64, scratch_operands = 0 : i64, tpu.core_type = #tpu.core_type<tc>, window_params = [{transform_indices = @transform_0, window_bounds = array<i64: 8, 128>}, {pipeline_mode = #tpu.pipeline_mode<synchronous>, transform_indices = @transform_1, window_bounds = array<i64: 128, 128>}, {pipeline_mode = #tpu.pipeline_mode<synchronous>, transform_indices = @transform_2, window_bounds = array<i64: 1, 128>}, {pipeline_mode = #tpu.pipeline_mode<synchronous>, transform_indices = @transform_3, window_bounds = array<i64: 128, 128>}, {pipeline_mode = #tpu.pipeline_mode<synchronous>, transform_indices = @transform_4, window_bounds = array<i64: 1, 128>}, {transform_indices = @transform_5, window_bounds = array<i64: 8, 128>}]} {
    %c0 = arith.constant 0 : index
    %c0_0 = arith.constant 0 : index
    %0 = vector.load %arg1[%c0, %c0_0] : memref<8x128xf32, #tpu.memory_space<vmem>>, vector<8x128xf32>
    %c0_1 = arith.constant 0 : index
    %c0_2 = arith.constant 0 : index
    %1 = vector.load %arg2[%c0_1, %c0_2] : memref<128x128xf32, #tpu.memory_space<vmem>>, vector<128x128xf32>
    %cst = arith.constant dense<0.000000e+00> : vector<8x128xf32>
    %2 = tpu.matmul %0, %1, %cst {dimension_numbers = #tpu.dot_dimension_numbers<[1], [0], [0], [1], [0, 0, 1, 1], [], []>} : vector<8x128xf32>, vector<128x128xf32>, vector<8x128xf32> -> vector<8x128xf32>
    %c0_3 = arith.constant 0 : index
    %c0_4 = arith.constant 0 : index
    %3 = vector.load %arg3[%c0_3, %c0_4] : memref<1x128xf32, #tpu.memory_space<vmem>>, vector<1x128xf32>
    %4 = vector.broadcast %3 : vector<1x128xf32> to vector<8x128xf32>
    %5 = arith.addf %2, %4 : vector<8x128xf32>
    %cst_5 = arith.constant 5.000000e-01 : f32
    %6 = vector.broadcast %cst_5 : f32 to vector<8x128xf32>
    %7 = arith.mulf %6, %5 : vector<8x128xf32>
    %cst_6 = arith.constant 0.707106769 : f32
    %8 = vector.broadcast %cst_6 : f32 to vector<8x128xf32>
    %9 = arith.mulf %5, %8 : vector<8x128xf32>
    %10 = math.erf %9 : vector<8x128xf32>
    %cst_7 = arith.constant 1.000000e+00 : f32
    %11 = vector.broadcast %cst_7 : f32 to vector<8x128xf32>
    %12 = arith.addf %11, %10 : vector<8x128xf32>
    %13 = arith.mulf %7, %12 : vector<8x128xf32>
    %c0_8 = arith.constant 0 : index
    %c0_9 = arith.constant 0 : index
    %14 = vector.load %arg4[%c0_8, %c0_9] : memref<128x128xf32, #tpu.memory_space<vmem>>, vector<128x128xf32>
    %cst_10 = arith.constant dense<0.000000e+00> : vector<8x128xf32>
    %15 = tpu.matmul %13, %14, %cst_10 {dimension_numbers = #tpu.dot_dimension_numbers<[1], [0], [0], [1], [0, 0, 1, 1], [], []>} : vector<8x128xf32>, vector<128x128xf32>, vector<8x128xf32> -> vector<8x128xf32>
    %c0_11 = arith.constant 0 : index
    %c0_12 = arith.constant 0 : index
    %16 = vector.load %arg5[%c0_11, %c0_12] : memref<1x128xf32, #tpu.memory_space<vmem>>, vector<1x128xf32>
    %17 = vector.broadcast %16 : vector<1x128xf32> to vector<8x128xf32>
    %18 = arith.addf %15, %17 : vector<8x128xf32>
    %c0_13 = arith.constant 0 : index
    %c0_14 = arith.constant 0 : index
    %19 = vector.load %arg6[%c0_13, %c0_14] : memref<8x128xf32, #tpu.memory_space<vmem>>, vector<8x128xf32>
    tpu.vector_store %arg6[%c0_13, %c0_14], %18 {strides = array<i32>} : memref<8x128xf32, #tpu.memory_space<vmem>>, vector<8x128xf32>,
    return
  }
  func.func @transform_0(%arg0: i32) -> (i32, i32) {
    %c0_i32 = arith.constant 0 : i32
    %c0_i32_0 = arith.constant 0 : i32
    return %arg0, %c0_i32 : i32, i32
  }
  func.func @transform_1(%arg0: i32) -> (i32, i32) {
    %c0_i32 = arith.constant 0 : i32
    %c0_i32_0 = arith.constant 0 : i32
    %c0_i32_1 = arith.constant 0 : i32
    return %c0_i32, %c0_i32_0 : i32, i32
  }
  func.func @transform_2(%arg0: i32) -> (i32, i32) {
    %c0_i32 = arith.constant 0 : i32
    %c0_i32_0 = arith.constant 0 : i32
    %c0_i32_1 = arith.constant 0 : i32
    return %c0_i32, %c0_i32_0 : i32, i32
  }
  func.func @transform_3(%arg0: i32) -> (i32, i32) {
    %c0_i32 = arith.constant 0 : i32
    %c0_i32_0 = arith.constant 0 : i32
    %c0_i32_1 = arith.constant 0 : i32
    return %c0_i32, %c0_i32_0 : i32, i32
  }
  func.func @transform_4(%arg0: i32) -> (i32, i32) {
    %c0_i32 = arith.constant 0 : i32
    %c0_i32_0 = arith.constant 0 : i32
    %c0_i32_1 = arith.constant 0 : i32
    return %c0_i32, %c0_i32_0 : i32, i32
  }
  func.func @transform_5(%arg0: i32) -> (i32, i32) {
    %c0_i32 = arith.constant 0 : i32
    %c0_i32_0 = arith.constant 0 : i32
    return %arg0, %c0_i32 : i32, i32
  }
}

</mosaic_0001>

<llo_original>
// kernel: _mlp_block_impl.1
$region0: #{_mlp_block_impl.1}
  #allocation0 [shape = 'u32[]', space=smem, size = 0x4, offset = 0x4, fixed_abs, tag = 'smem constant byte address 0x4 - core index']
  #allocation1 [shape = 'u32[72,128]{1,0:T(1,128)}', space=vmem, size = 0x9000, scoped, tag = 'internal scratch']
  %s0 = inlined_call_operand.vmem [shape: f32[16,128], index: 0, kind: input, shape index: {}]
  %s1 = inlined_call_operand.hbm [shape: f32[128,128], index: 1, kind: input, shape index: {}]
  %s2 = inlined_call_operand.vmem [shape: f32[1,128], index: 2, kind: input, shape index: {}]
  %s3 = inlined_call_operand.hbm [shape: f32[128,128], index: 3, kind: input, shape index: {}]
  %s4 = inlined_call_operand.vmem [shape: f32[1,128], index: 4, kind: input, shape index: {}]
  %s5 = inlined_call_operand.vmem [shape: f32[16,128], index: 5, kind: output, shape index: {}]
  %s6 = sld [smem:[#allocation0]]
  $region61: #{_mlp_block_impl.1} parent=0
    _
  %s8 = ssub.s32 1, %s6
  %s9 = scalar_select 0, %s8, %s6
  $region1: #{_mlp_block_impl.1} parent=0
    #allocation2 [shape = 'u8[65536]{0}', space=vmem, size = 0x10000, scoped, tag = 'input window, operand 1, single buffered']
    #allocation3 [shape = 's32[2]{0}', space=sflag, size = 0x8, scoped, tag = 'scoped memory for _mlp_block_impl.1']
    #allocation4 [shape = 'u8[65536]{0}', space=vmem, size = 0x10000, scoped, tag = 'input window, operand 3, single buffered']
    #allocation5 [shape = 's32[1]{0}', space=sflag, size = 0x4, scoped, tag = 'scoped memory for _mlp_block_impl.1']
    %10 = vsyncpa [#allocation3], 0
    %11 = vsyncpa [#allocation5], 0
    loop: start=0, step=1, limit=4
    $region2: #{_mlp_block_impl.1} parent=1 // loop_pre_header
      _
    $region3: #{_mlp_block_impl.1} parent=1 // loop_header
      %s13 = sphi 0, %s17
      %p14 = scmp.ge.s32.totalorder %s13, 4
      %s23 = sphi 0, %s25
      %s26 = sphi 0, %s23
      %s27 = sphi 0, %s26
      %s43 = sphi 0, %s27
      %s47 = sphi 0, %s47
      %s49 = sphi 0, %s47
      %s50 = sphi 0, %s49
      %s64 = sphi 0, %s50
      %s68 = sphi 0, %s68
      %s70 = sphi 0, %s68
      %s71 = sphi 0, %s70
      %s85 = sphi 0, %s71
      %s89 = sphi 0, %s89
      %s91 = sphi 0, %s89
      %s92 = sphi 0, %s91
      %s106 = sphi 0, %s92
      %s110 = sphi 0, %s110
      %s112 = sphi 0, %s110
      %s113 = sphi 0, %s112
      %s127 = sphi 0, %s113
      %s133 = sphi 0, %s135
      %s136 = sphi 0, %s133
      %s137 = sphi 0, %s136
      %s153 = sphi 0, %s137
    $region4: #{_mlp_block_impl.1} parent=1 // loop_header_branch
      %16 = sbr.rel (%p14) target = $region8
    $region5: #{_mlp_block_impl.1} parent=1 // loop_body
      %s18 = ssub.s32 %s13, 1
      %s19 = ssub.s32 %s13, 2
      %s20 = sadd.s32 %s13, 1
      %s21 = ssub.s32 %s13, %s20
      %p22 = scmp.eq.s32.totalorder %s21, 0
      %s24 = sadd.s32 %s23, 1
      %s25 = scalar_select %p22, %s23, %s24
      %p28 = pneg %p22
      %p29 = scmp.eq.s32.totalorder %s13, 1
      %p30 = por %p28, %p29
      %p31 = scmp.ne.s32.totalorder %s23, %s26
      %p32 = scmp.eq.s32.totalorder %s13, 0
      %p33 = por %p31, %p32
      %p34 = scmp.ne.s32.totalorder %s23, %s26
      %p35 = scmp.eq.s32.totalorder %s18, 1
      %p36 = por %p34, %p35
      %p37 = scmp.ne.s32.totalorder %s26, %s27
      %p38 = scmp.eq.s32.totalorder %s18, 0
      %p39 = por %p37, %p38
      %p40 = scmp.ne.s32.totalorder %s26, %s27
      %p41 = scmp.eq.s32.totalorder %s19, 1
      %p42 = por %p40, %p41
      %p44 = scmp.ne.s32.totalorder %s27, %s43
      %p45 = scmp.eq.s32.totalorder %s19, 0
      %p46 = por %p44, %p45
      %s48 = sadd.s32 %s47, 1
      %p51 = scmp.eq.s32.totalorder %s13, 1
      %p52 = scmp.ne.s32.totalorder %s47, %s49
      %p53 = scmp.eq.s32.totalorder %s13, 0
      %p54 = por %p52, %p53
      %p55 = scmp.ne.s32.totalorder %s47, %s49
      %p56 = scmp.eq.s32.totalorder %s18, 1
      %p57 = por %p55, %p56
      %p58 = scmp.ne.s32.totalorder %s49, %s50
      %p59 = scmp.eq.s32.totalorder %s18, 0
      %p60 = por %p58, %p59
      %p61 = scmp.ne.s32.totalorder %s49, %s50
      %p62 = scmp.eq.s32.totalorder %s19, 1
      %p63 = por %p61, %p62
      %p65 = scmp.ne.s32.totalorder %s50, %s64
      %p66 = scmp.eq.s32.totalorder %s19, 0
      %p67 = por %p65, %p66
      %s69 = sadd.s32 %s68, 1
      %p72 = scmp.eq.s32.totalorder %s13, 1
      %p73 = scmp.ne.s32.totalorder %s68, %s70
      %p74 = scmp.eq.s32.totalorder %s13, 0
      %p75 = por %p73, %p74
      %p76 = scmp.ne.s32.totalorder %s68, %s70
      %p77 = scmp.eq.s32.totalorder %s18, 1
      %p78 = por %p76, %p77
      %p79 = scmp.ne.s32.totalorder %s70, %s71
      %p80 = scmp.eq.s32.totalorder %s18, 0
      %p81 = por %p79, %p80
      %p82 = scmp.ne.s32.totalorder %s70, %s71
      %p83 = scmp.eq.s32.totalorder %s19, 1
      %p84 = por %p82, %p83
      %p86 = scmp.ne.s32.totalorder %s71, %s85
      %p87 = scmp.eq.s32.totalorder %s19, 0
      %p88 = por %p86, %p87
      %s90 = sadd.s32 %s89, 1
      %p93 = scmp.eq.s32.totalorder %s13, 1
      %p94 = scmp.ne.s32.totalorder %s89, %s91
      %p95 = scmp.eq.s32.totalorder %s13, 0
      %p96 = por %p94, %p95
      %p97 = scmp.ne.s32.totalorder %s89, %s91
      %p98 = scmp.eq.s32.totalorder %s18, 1
      %p99 = por %p97, %p98
      %p100 = scmp.ne.s32.totalorder %s91, %s92
      %p101 = scmp.eq.s32.totalorder %s18, 0
      %p102 = por %p100, %p101
      %p103 = scmp.ne.s32.totalorder %s91, %s92
      %p104 = scmp.eq.s32.totalorder %s19, 1
      %p105 = por %p103, %p104
      %p107 = scmp.ne.s32.totalorder %s92, %s106
      %p108 = scmp.eq.s32.totalorder %s19, 0
      %p109 = por %p107, %p108
      %s111 = sadd.s32 %s110, 1
      %p114 = scmp.eq.s32.totalorder %s13, 1
      %p115 = scmp.ne.s32.totalorder %s110, %s112
      %p116 = scmp.eq.s32.totalorder %s13, 0
      %p117 = por %p115, %p116
      %p118 = scmp.ne.s32.totalorder %s110, %s112
      %p119 = scmp.eq.s32.totalorder %s18, 1
      %p120 = por %p118, %p119
      %p121 = scmp.ne.s32.totalorder %s112, %s113
      %p122 = scmp.eq.s32.totalorder %s18, 0
      %p123 = por %p121, %p122
      %p124 = scmp.ne.s32.totalorder %s112, %s113
      %p125 = scmp.eq.s32.totalorder %s19, 1
      %p126 = por %p124, %p125
      %p128 = scmp.ne.s32.totalorder %s113, %s127
      %p129 = scmp.eq.s32.totalorder %s19, 0
      %p130 = por %p128, %p129
      %s131 = ssub.s32 %s13, %s20
      %p132 = scmp.eq.s32.totalorder %s131, 0
      %s134 = sadd.s32 %s133, 1
      %s135 = scalar_select %p132, %s133, %s134
      %p138 = pneg %p132
      %p139 = scmp.eq.s32.totalorder %s13, 1
      %p140 = por %p138, %p139
      %p141 = scmp.ne.s32.totalorder %s133, %s136
      %p142 = scmp.eq.s32.totalorder %s13, 0
      %p143 = por %p141, %p142
      %p144 = scmp.ne.s32.totalorder %s133, %s136
      %p145 = scmp.eq.s32.totalorder %s18, 1
      %p146 = por %p144, %p145
      %p147 = scmp.ne.s32.totalorder %s136, %s137
      %p148 = scmp.eq.s32.totalorder %s18, 0
      %p149 = por %p147, %p148
      %p150 = scmp.ne.s32.totalorder %s136, %s137
      %p151 = scmp.eq.s32.totalorder %s19, 1
      %p152 = por %p150, %p151
      %p154 = scmp.ne.s32.totalorder %s137, %s153
      %p155 = scmp.eq.s32.totalorder %s19, 0
      %p156 = por %p154, %p155
      %p157 = scmp.le.s32.totalorder 1, %s13
      %p158 = scmp.lt.s32.totalorder %s13, 3
      %p159 = pnand %p157, %p158
      %p160 = pneg %p159
      // Predicated region
      $region9: #{_mlp_block_impl.1} parent=5 // pred_check
        _
      $region10: #{_mlp_block_impl.1} parent=5 // pred_check_branch
        %162 = sbr.rel (%p159) target = $region12
      $region11: #{_mlp_block_impl.1} parent=5 // pred_region
        %s163 = ssub.s32 %s13, 1
        // Predicated region
        $region13: #{_mlp_block_impl.1} parent=11 // pred_check
          %p164 = pneg %p60
        $region14: #{_mlp_block_impl.1} parent=11 // pred_check_branch
          %166 = sbr.rel (%p164) target = $region16
        $region15: #{_mlp_block_impl.1} parent=11 // pred_region
          %168 = vsyncadd [#allocation3], 0
          %s169 = sshll.u32 %s1, 4
          %s170 = int_to_ptr.hbm [resolvable:$true] %s169
          %s171 = sshll.u32 [#allocation2], 4
          %s172 = int_to_ptr.vmem [resolvable:$true] %s171
          %177 = dma.hbm_to_vmem [thread:$0]  %s170, 2048, %s172, [#allocation3], 128, 128, 8
        $region16: #{_mlp_block_impl.1} parent=11 // pred_fallthru
          _
        // Predicated region
        $region17: #{_mlp_block_impl.1} parent=11 // pred_check
          %p178 = pneg %p81
        $region18: #{_mlp_block_impl.1} parent=11 // pred_check_branch
          %180 = sbr.rel (%p178) target = $region20
        $region19: #{_mlp_block_impl.1} parent=11 // pred_region
          _
        $region20: #{_mlp_block_impl.1} parent=11 // pred_fallthru
          _
        // Predicated region
        $region21: #{_mlp_block_impl.1} parent=11 // pred_check
          %p181 = pneg %p102
        $region22: #{_mlp_block_impl.1} parent=11 // pred_check_branch
          %183 = sbr.rel (%p181) target = $region24
        $region23: #{_mlp_block_impl.1} parent=11 // pred_region
          %185 = vsyncadd [#allocation5], 0
          %s186 = sshll.u32 %s3, 4
          %s187 = int_to_ptr.hbm [resolvable:$true] %s186
          %s188 = sshll.u32 [#allocation4], 4
          %s189 = int_to_ptr.vmem [resolvable:$true] %s188
          %194 = dma.hbm_to_vmem [thread:$0]  %s187, 2048, %s189, [#allocation5], 128, 128, 8
        $region24: #{_mlp_block_impl.1} parent=11 // pred_fallthru
          _
        // Predicated region
        $region25: #{_mlp_block_impl.1} parent=11 // pred_check
          %p195 = pneg %p123
        $region26: #{_mlp_block_impl.1} parent=11 // pred_check_branch
          %197 = sbr.rel (%p195) target = $region28
        $region27: #{_mlp_block_impl.1} parent=11 // pred_region
          _
        $region28: #{_mlp_block_impl.1} parent=11 // pred_fallthru
          _
      $region12: #{_mlp_block_impl.1} parent=5 // pred_fallthru
        _
      %p198 = scmp.lt.s32.totalorder %s13, 2
      // Predicated region
      $region29: #{_mlp_block_impl.1} parent=5 // pred_check
        %p199 = pneg %p198
      $region30: #{_mlp_block_impl.1} parent=5 // pred_check_branch
        %201 = sbr.rel (%p199) target = $region32
      $region31: #{_mlp_block_impl.1} parent=5 // pred_region
        // Predicated region
        $region33: #{_mlp_block_impl.1} parent=31 // pred_check
          %p202 = pneg %p33
        $region34: #{_mlp_block_impl.1} parent=31 // pred_check_branch
          %204 = sbr.rel (%p202) target = $region36
        $region35: #{_mlp_block_impl.1} parent=31 // pred_region
          %p205 = scmp.lt.s32.totalorder %s13, 1
          %s206 = scalar_select %p205, %s13, 1
          %s207 = smul.addr %s206, 8
          %s208 = scalar_lea.vmem %s0, %s207
        $region36: #{_mlp_block_impl.1} parent=31 // pred_fallthru
          _
      $region32: #{_mlp_block_impl.1} parent=5 // pred_fallthru
        _
      %p209 = scmp.le.s32.totalorder 1, %s13
      %p210 = scmp.lt.s32.totalorder %s13, 3
      %p211 = pnand %p209, %p210
      %p212 = pneg %p211
      // Predicated region
      $region37: #{_mlp_block_impl.1} parent=5 // pred_check
        _
      $region38: #{_mlp_block_impl.1} parent=5 // pred_check_branch
        %214 = sbr.rel (%p211) target = $region40
      $region39: #{_mlp_block_impl.1} parent=5 // pred_region
        %s215 = ssub.s32 %s13, 1
        // Predicated region
        $region41: #{_mlp_block_impl.1} parent=39 // pred_check
          %p216 = pneg %p60
        $region42: #{_mlp_block_impl.1} parent=39 // pred_check_branch
          %218 = sbr.rel (%p216) target = $region44
        $region43: #{_mlp_block_impl.1} parent=39 // pred_region
          %220 = dma.done [#allocation3], 2048
        $region44: #{_mlp_block_impl.1} parent=39 // pred_fallthru
          _
        // Predicated region
        $region45: #{_mlp_block_impl.1} parent=39 // pred_check
          %p221 = pneg %p102
        $region46: #{_mlp_block_impl.1} parent=39 // pred_check_branch
          %223 = sbr.rel (%p221) target = $region48
        $region47: #{_mlp_block_impl.1} parent=39 // pred_region
          %225 = dma.done [#allocation5], 2048
        $region48: #{_mlp_block_impl.1} parent=39 // pred_fallthru
          _
        %p226 = scmp.lt.s32.totalorder %s18, 1
        %s227 = scalar_select %p226, %s18, 1
        %s228 = smul.addr %s227, 8
        %s229 = scalar_lea.vmem %s0, %s228
        %p230 = pneg %p39
        %p231 = pneg %p36
        %p232 = pneg %p60
        %p233 = pneg %p57
        %p234 = pneg %p81
        %p235 = pneg %p78
        %p236 = pneg %p102
        %p237 = pneg %p99
        %p238 = pneg %p123
        %p239 = pneg %p120
        %p240 = pneg %p149
        %p241 = pneg %p146
        %p242 = scmp.lt.s32.totalorder %s18, 1
        %s243 = scalar_select %p242, %s18, 1
        %s244 = smul.addr %s243, 8
        %s245 = scalar_lea.vmem %s5, %s244
        %p246 = scmp.lt.s32.totalorder %s18, 1
        %s247 = scalar_select %p246, %s18, 1
        %s248 = smul.addr %s247, 8
        %s249 = scalar_lea.vmem %s0, %s248
        %p250 = scmp.lt.s32.totalorder %s18, 1
        %s251 = scalar_select %p250, %s18, 1
        %s252 = smul.addr %s251, 8
        %s253 = scalar_lea.vmem %s5, %s252
        %v254 = vld [vmem:[%s249] sm:$0xff]
        %v255 = vld [vmem:[#allocation2] sm:$0xff]
        %v256 = vld [vmem:[#allocation2 + $0x8] sm:$0xff]
        %v257 = vld [vmem:[#allocation2 + $0x10] sm:$0xff]
        %v258 = vld [vmem:[#allocation2 + $0x18] sm:$0xff]
        %v259 = vld [vmem:[#allocation2 + $0x20] sm:$0xff]
        %v260 = vld [vmem:[#allocation2 + $0x28] sm:$0xff]
        %v261 = vld [vmem:[#allocation2 + $0x30] sm:$0xff]
        %v262 = vld [vmem:[#allocation2 + $0x38] sm:$0xff]
        %v263 = vld [vmem:[#allocation2 + $0x40] sm:$0xff]
        %v264 = vld [vmem:[#allocation2 + $0x48] sm:$0xff]
        %v265 = vld [vmem:[#allocation2 + $0x50] sm:$0xff]
        %v266 = vld [vmem:[#allocation2 + $0x58] sm:$0xff]
        %v267 = vld [vmem:[#allocation2 + $0x60] sm:$0xff]
        %v268 = vld [vmem:[#allocation2 + $0x68] sm:$0xff]
        %v269 = vld [vmem:[#allocation2 + $0x70] sm:$0xff]
        %v270 = vld [vmem:[#allocation2 + $0x78] sm:$0xff]
        %v271 = vld [vmem:[%s2] sm:$0x1]
        %v273 = vperm.slane %v271, 0
        %275 = vmatpush.msra.mxu0 %v270
        %276 = vmatpush.msra.mxu0 %v269
        %277 = vmatpush.msra.mxu0 %v268
        %278 = vmatpush.msra.mxu0 %v267
        %279 = vmatpush.msra.mxu0 %v266
        %280 = vmatpush.msra.mxu0 %v265
        %281 = vmatpush.msra.mxu0 %v264
        %282 = vmatpush.msra.mxu0 %v263
        %283 = vmatpush.msra.mxu0 %v262
        %284 = vmatpush.msra.mxu0 %v261
        %285 = vmatpush.msra.mxu0 %v260
        %286 = vmatpush.msra.mxu0 %v259
        %287 = vmatpush.msra.mxu0 %v258
        %288 = vmatpush.msra.mxu0 %v257
        %289 = vmatpush.msra.mxu0 %v256
        %290 = vmatpush.msra.mxu0 %v255
        %291 = vmatmul.f32.gmra.mxu0 %v254
        %v292 = vpop.f32.mrf.mxu0
        %v293 = vadd.f32 %v273, %v292
        %294 = vdwg.mxu0
        %v295 = vmul.f32 %v293, 0.5
        %v296 = vmul.f32 %v293, 0.70710677
        %v297 = vmul.f32 %v296, %v296
        %v298 = vmin.f32 16.0, %v297
        %v299 = vmul.f32 %v298, 2.1237322e-06
        %v300 = vadd.f32 %v299, 0.00028619796
        %v301 = vmul.f32 %v298, %v300
        %v302 = vadd.f32 %v301, 0.0036580483
        %v303 = vmul.f32 %v298, %v302
        %v304 = vadd.f32 %v303, 0.05243302
        %v305 = vmul.f32 %v298, %v304
        %v306 = vadd.f32 %v305, 0.18741608
        %v307 = vmul.f32 %v298, %v306
        %v308 = vadd.f32 %v307, 1.1283791
        %v309 = vmul.f32 %v296, %v308
        %v310 = vmul.f32 %v298, 3.8918573e-05
        %v311 = vadd.f32 %v310, 0.001143296
        %v312 = vmul.f32 %v298, %v311
        %v313 = vadd.f32 %v312, 0.014752088
        %v314 = vmul.f32 %v298, %v313
        %v315 = vadd.f32 %v314, 0.112945676
        %v316 = vmul.f32 %v298, %v315
        %v317 = vadd.f32 %v316, 0.4994258
        %v318 = vmul.f32 %v298, %v317
        %v319 = vadd.f32 %v318, 1.0
        %v320 = vrcp.pop %v319
        %v321 = vmul.f32 %v319, %v320
        %v322 = vsub.f32 1.0, %v321
        %v323 = vmul.f32 %v320, %v322
        %v324 = vadd.f32 %v320, %v323
        %vm325 = vweird.f32 %v319
        %vm326 = vweird.f32 %v320
        %vm327 = vmor %vm325, %vm326
        %v328 = vsel %vm327, %v320, %v324
        %v329 = vand.u32 2147483647, %v319
        %vm330 = vcmp.eq.f32.partialorder %v329, 8.507059e+37
        %v331 = vand.u32 %v319, 2147483648
        %v332 = vor.u32 1.1754944e-38, %v331
        %v333 = vsel %vm330, %v332, %v328
        %v334 = vmul.f32 %v309, %v333
        %v335 = vmin.f32 %v334, 1.0
        %v336 = vmax.f32 %v335, -1.0
        %v337 = vadd.f32 %v336, 1.0
        %v338 = vmul.f32 %v295, %v337
        %v339 = vld [vmem:[#allocation4] sm:$0xff]
        %v340 = vld [vmem:[#allocation4 + $0x8] sm:$0xff]
        %v341 = vld [vmem:[#allocation4 + $0x10] sm:$0xff]
        %v342 = vld [vmem:[#allocation4 + $0x18] sm:$0xff]
        %v343 = vld [vmem:[#allocation4 + $0x20] sm:$0xff]
        %v344 = vld [vmem:[#allocation4 + $0x28] sm:$0xff]
        %v345 = vld [vmem:[#allocation4 + $0x30] sm:$0xff]
        %v346 = vld [vmem:[#allocation4 + $0x38] sm:$0xff]
        %v347 = vld [vmem:[#allocation4 + $0x40] sm:$0xff]
        %v348 = vld [vmem:[#allocation4 + $0x48] sm:$0xff]
        %v349 = vld [vmem:[#allocation4 + $0x50] sm:$0xff]
        %v350 = vld [vmem:[#allocation4 + $0x58] sm:$0xff]
        %v351 = vld [vmem:[#allocation4 + $0x60] sm:$0xff]
        %v352 = vld [vmem:[#allocation4 + $0x68] sm:$0xff]
        %v353 = vld [vmem:[#allocation4 + $0x70] sm:$0xff]
        %v354 = vld [vmem:[#allocation4 + $0x78] sm:$0xff]
        %v355 = vld [vmem:[%s4] sm:$0x1]
        %v357 = vperm.slane %v355, 0
        %359 = vmatpush.msra.mxu0 %v354
        %360 = vmatpush.msra.mxu0 %v353
        %361 = vmatpush.msra.mxu0 %v352
        %362 = vmatpush.msra.mxu0 %v351
        %363 = vmatpush.msra.mxu0 %v350
        %364 = vmatpush.msra.mxu0 %v349
        %365 = vmatpush.msra.mxu0 %v348
        %366 = vmatpush.msra.mxu0 %v347
        %367 = vmatpush.msra.mxu0 %v346
        %368 = vmatpush.msra.mxu0 %v345
        %369 = vmatpush.msra.mxu0 %v344
        %370 = vmatpush.msra.mxu0 %v343
        %371 = vmatpush.msra.mxu0 %v342
        %372 = vmatpush.msra.mxu0 %v341
        %373 = vmatpush.msra.mxu0 %v340
        %374 = vmatpush.msra.mxu0 %v339
        %375 = vmatmul.f32.gmra.mxu0 %v338
        %v376 = vpop.f32.mrf.mxu0
        %v377 = vadd.f32 %v357, %v376
        %378 = vdwg.mxu0
        %379 = vst [vmem:[%s253] sm:$0xff] %v377
        %p380 = scmp.lt.s32.totalorder %s18, 1
        %s381 = scalar_select %p380, %s18, 1
        %s382 = smul.addr %s381, 8
        %s383 = scalar_lea.vmem %s5, %s382
        // Predicated region
        $region49: #{_mlp_block_impl.1} parent=39 // pred_check
          %p384 = pneg %p146
        $region50: #{_mlp_block_impl.1} parent=39 // pred_check_branch
          %386 = sbr.rel (%p384) target = $region52
        $region51: #{_mlp_block_impl.1} parent=39 // pred_region
          _
        $region52: #{_mlp_block_impl.1} parent=39 // pred_fallthru
          _
      $region40: #{_mlp_block_impl.1} parent=5 // pred_fallthru
        _
      %p387 = scmp.le.s32.totalorder 2, %s13
      // Predicated region
      $region53: #{_mlp_block_impl.1} parent=5 // pred_check
        %p388 = pneg %p387
      $region54: #{_mlp_block_impl.1} parent=5 // pred_check_branch
        %390 = sbr.rel (%p388) target = $region56
      $region55: #{_mlp_block_impl.1} parent=5 // pred_region
        %s391 = ssub.s32 %s13, 2
        // Predicated region
        $region57: #{_mlp_block_impl.1} parent=55 // pred_check
          %p392 = pneg %p152
        $region58: #{_mlp_block_impl.1} parent=55 // pred_check_branch
          %394 = sbr.rel (%p392) target = $region60
        $region59: #{_mlp_block_impl.1} parent=55 // pred_region
          %p395 = scmp.lt.s32.totalorder %s19, 1
          %s396 = scalar_select %p395, %s19, 1
          %s397 = smul.addr %s396, 8
          %s398 = scalar_lea.vmem %s5, %s397
        $region60: #{_mlp_block_impl.1} parent=55 // pred_fallthru
          _
      $region56: #{_mlp_block_impl.1} parent=5 // pred_fallthru
        _
    $region6: #{_mlp_block_impl.1} parent=1 // loop_footer
      %s17 = sadd.s32 1, %s13
    $region7: #{_mlp_block_impl.1} parent=1 // loop_footer_branch
      %12 = sbr.rel target = $region3
    $region8: #{_mlp_block_impl.1} parent=1 // loop_exit
      _
    %399 = vsyncpa [#allocation3], 1
    %s400 = scalar_lea.sflag [#allocation3], 1
    %401 = vsyncpa %s400, 1
    %402 = vsyncpa [#allocation5], 1

</llo_original>
